<compile_context>
chip_gen: v5e
topology: v5e:2x2
jax: 0.10.0
libtpu: 0.0.40
codegen_flags: <defaults>
</compile_context>

<pallas_src>
import jax
import jax.numpy as jnp
from jax import lax
from jax.experimental import pallas as pl
from jax.experimental.pallas import tpu as pltpu

KSIZE = 5          # Conv1d kernel size
PAD = 2            # 'same' padding
GUARD = 8          # sublane-aligned zero guard band (> 2*PAD)
RES_SCALE = 0.3    # residual scale, folded into conv-2 weights/bias
LANE = 128         # channel axis padded to a multiple of the lane width
TARGET_M = 256     # target MXU M-dim fill per grid step (v6e/v7x systolic height)


def _round_up(x, m):
    return (x + m - 1) // m * m


def _cdiv(a, b):
    return (a + b - 1) // b


def resblock_kernel(x_ref, w1_ref, b1_ref, w2_ref, b2_ref, o_ref,
                    pad_ref, acc_ref):
    # x_ref   : (bt, L, C)      input block (residual + conv-1 source), f32
    # w1, w2  : (5, C, C)       tap matrices (k, c_in, c_out), compute dtype
    # b1, b2  : (1, C)          f32 (0.3 already folded into w2/b2)
    # o_ref   : (bt, L, C)      f32
    # pad_ref : (GUARD + bt*seg + GUARD, C)  packed padded activations
    #           element b lives at rows [GUARD + b*seg, GUARD + b*seg + L)
    # acc_ref : (bt*seg, C) f32 accumulator; output (b, l) at row b*seg + l
    bt, L, C = x_ref.shape
    m_a = acc_ref.shape[0]
    seg = m_a // bt
    gap = seg - L
    pdt = pad_ref.dtype

    # ---- zero only the guard/gap rows (data rows are overwritten below).
    # Re-done every step so correctness does not depend on which TensorCore
    # ran the previous step of the 'parallel' grid axis.
    guard_zeros = jnp.zeros((GUARD, C), pdt)
    gap_zeros = jnp.zeros((gap, C), pdt)
    pad_ref[pl.ds(0, GUARD), :] = guard_zeros
    for b in range(bt):
        pad_ref[pl.ds(GUARD + b * seg + L, gap), :] = gap_zeros
    pad_ref[pl.ds(GUARD + m_a, GUARD), :] = guard_zeros

    # ---- ReLU(x) packed into the padded scratch (sublane-aligned stores) ----
    for b in range(bt):
        pad_ref[pl.ds(GUARD + b * seg, L), :] = (
            jnp.maximum(x_ref[b], 0.0).astype(pdt))

    # ---- Conv1d #1: 5 shifted big dots; bias folded into the accumulator ----
    # TODO(synk): im2col variant -- one (m_a, 5C)@(5C, C) dot per conv -- once
    # production C is lane-dense; kept as 5 shifted dots here for simplicity.
    acc_ref[...] = jnp.broadcast_to(b1_ref[...], (m_a, C))
    for k in range(KSIZE):
        acc_ref[...] += jnp.dot(pad_ref[pl.ds(GUARD - PAD + k, m_a), :],
                                w1_ref[k],
                                preferred_element_type=jnp.float32)

    # ---- ReLU + re-pack the intermediate activation into the same scratch ----
    for b in range(bt):
        pad_ref[pl.ds(GUARD + b * seg, L), :] = (
            jnp.maximum(acc_ref[pl.ds(b * seg, L), :], 0.0).astype(pdt))

    # ---- Conv1d #2 (0.3 residual scale pre-folded into w2/b2) ----
    acc_ref[...] = jnp.broadcast_to(b2_ref[...], (m_a, C))
    for k in range(KSIZE):
        acc_ref[...] += jnp.dot(pad_ref[pl.ds(GUARD - PAD + k, m_a), :],
                                w2_ref[k],
                                preferred_element_type=jnp.float32)

    # ---- residual: out = x + 0.3 * res_block(x)  (scale already folded) ----
    for b in range(bt):
        o_ref[b] = x_ref[b] + acc_ref[pl.ds(b * seg, L), :].astype(o_ref.dtype)


def resblock_pallas_nlc(x_nlc, w1_t, b1, w2_t, b2, *,
                        compute_dtype=jnp.float32):
    """Channels-last ResBlock core.

    x_nlc : (N, L, C) f32;  w*_t : (KSIZE, C_in, C_out);  b* : (C,)
    compute_dtype: dtype of the MXU operands (activation scratch + weights).
      float32 -> exact parity; bfloat16 -> ~2x MXU / weight-DMA on v6e/v7x
      (accumulation, ReLU, bias and the residual add stay f32).
    """
    N, L, C = x_nlc.shape
    c_pad = _round_up(max(C, LANE), LANE)        # lane-dense channel axis
    seg = _round_up(L, GUARD) + GUARD            # per-element stride in scratch
    cbytes = jnp.dtype(compute_dtype).itemsize

    # ---- batch-tile size: fill the MXU M dim, stay inside the VMEM budget ----
    bt = max(1, min(N, max(1, TARGET_M // seg)))

    def vmem_est(bt_):
        m_a_ = bt_ * seg
        io = 2 * 2 * bt_ * L * c_pad * 4                      # x + out, 2-buffered
        wts = 2 * KSIZE * c_pad * c_pad * cbytes              # single-buffered
        bia = 2 * 2 * c_pad * 4
        scr = (m_a_ + 2 * GUARD) * c_pad * cbytes + m_a_ * c_pad * 4
        return io + wts + bia + scr

    VMEM_BUDGET = 40 * 2**20
    while bt > 1 and vmem_est(bt) > VMEM_BUDGET:
        bt -= 1
    # If the whole batch fits one under-filled tile, split it so both v7x
    # TensorCores get work (no cost on single-TC v5e/v6e at these sizes).
    if N >= 2 and _cdiv(N, bt) < 2 and bt * seg < TARGET_M:
        bt = _cdiv(N, 2)

    n_tiles = _cdiv(N, bt)
    n_pad = n_tiles * bt
    m_a = bt * seg
    tot = GUARD + m_a + GUARD

    # ---- pad batch & channels (zero-padded channels stay exactly zero) ----
    x_p = x_nlc.astype(jnp.float32)
    if n_pad != N or c_pad != C:
        x_p = jnp.pad(x_p, ((0, n_pad - N), (0, 0), (0, c_pad - C)))

    def pad_w(w):
        return jnp.pad(w, ((0, 0), (0, c_pad - C), (0, c_pad - C)))

    def pad_b(b):
        return jnp.pad(b, (0, c_pad - C))

    w1_p = pad_w(w1_t).astype(compute_dtype)
    w2_p = pad_w(w2_t * RES_SCALE).astype(compute_dtype)     # fold 0.3 (weights)
    b1_p = pad_b(b1).reshape(1, c_pad).astype(jnp.float32)
    b2_p = pad_b(b2 * RES_SCALE).reshape(1, c_pad).astype(jnp.float32)  # fold 0.3

    # Explicit scoped-VMEM budget, capped well below v7x's 64 MiB physical VMEM.
    vmem_limit = int(min(48 * 2**20, max(16 * 2**20, int(1.5 * vmem_est(bt)))))

    def const_spec(shape):
        # Constant index_map, never re-fetched -> single-buffer it.
        return pl.BlockSpec(shape, lambda n: (0,) * len(shape),
                            pipeline_mode=pl.Buffered(1))

    out = pl.pallas_call(
        resblock_kernel,
        out_shape=jax.ShapeDtypeStruct((n_pad, L, c_pad), jnp.float32),
        grid_spec=pltpu.PrefetchScalarGridSpec(
            num_scalar_prefetch=0,
            grid=(n_tiles,),
            in_specs=[
                pl.BlockSpec((bt, L, c_pad), lambda n: (n, 0, 0)),
                const_spec((KSIZE, c_pad, c_pad)),   # w1
                const_spec((1, c_pad)),              # b1
                const_spec((KSIZE, c_pad, c_pad)),   # w2 (0.3 folded)
                const_spec((1, c_pad)),              # b2 (0.3 folded)
            ],
            out_specs=pl.BlockSpec((bt, L, c_pad), lambda n: (n, 0, 0)),
            scratch_shapes=[
                pltpu.VMEM((tot, c_pad), compute_dtype),   # packed padded acts
                pltpu.VMEM((m_a, c_pad), jnp.float32),     # f32 accumulator
            ],
        ),
        compiler_params=pltpu.CompilerParams(
            dimension_semantics=("parallel",),
            vmem_limit_bytes=vmem_limit),
    )(x_p, w1_p, b1_p, w2_p, b2_p)

    return out[:N, :, :C]


def resblock_pallas(x_ncl, w1, b1, w2, b2, *, compute_dtype=jnp.float32):
    """NCL (PyTorch Conv1d layout) adapter: (N, C, L) -> (N, C, L).

    The transposes exist only for PyTorch layout parity; keep activations
    channels-last end-to-end in a real model and call resblock_pallas_nlc."""
    N, C, L = x_ncl.shape
    x_nlc = jnp.transpose(x_ncl, (0, 2, 1)).astype(jnp.float32)   # (N, L, C)
    # torch weight (c_out, c_in, k) -> (k, c_in, c_out) tap matrices (tiny)
    w1_t = jnp.transpose(w1, (2, 1, 0)).astype(jnp.float32)
    w2_t = jnp.transpose(w2, (2, 1, 0)).astype(jnp.float32)
    out_nlc = resblock_pallas_nlc(
        x_nlc, w1_t, b1.astype(jnp.float32), w2_t, b2.astype(jnp.float32),
        compute_dtype=compute_dtype)
    return jnp.transpose(out_nlc, (0, 2, 1))


def resblock_ref(x_ncl, w1, b1, w2, b2):
    """Pure-JAX reference matching the PyTorch forward."""
    h = jax.nn.relu(x_ncl)
    h = lax.conv_general_dilated(h, w1, (1,), [(PAD, PAD)],
                                 dimension_numbers=("NCH", "OIH", "NCH"))
    h = h + b1[None, :, None]
    h = jax.nn.relu(h)
    h = lax.conv_general_dilated(h, w2, (1,), [(PAD, PAD)],
                                 dimension_numbers=("NCH", "OIH", "NCH"))
    h = h + b2[None, :, None]
    return x_ncl + RES_SCALE * h


if __name__ == "__main__":
    # Small shapes consistent with Conv1d(dim, dim, 5, padding=2)
    N, DIM, L = 2, 8, 16

    key = jax.random.PRNGKey(0)
    kx, kw1, kb1, kw2, kb2 = jax.random.split(key, 5)

    x = jax.random.normal(kx, (N, DIM, L), dtype=jnp.float32)

    # Deterministic PyTorch-style init: U(-1/sqrt(fan_in), 1/sqrt(fan_in))
    fan_in = DIM * KSIZE
    bound = 1.0 / (fan_in ** 0.5)
    w1 = jax.random.uniform(kw1, (DIM, DIM, KSIZE), jnp.float32, -bound, bound)
    b1 = jax.random.uniform(kb1, (DIM,), jnp.float32, -bound, bound)
    w2 = jax.random.uniform(kw2, (DIM, DIM, KSIZE), jnp.float32, -bound, bound)
    b2 = jax.random.uniform(kb2, (DIM,), jnp.float32, -bound, bound)

    ref = resblock_ref(x, w1, b1, w2, b2)

    # f32 path: exact PyTorch parity.
    out = jax.block_until_ready(resblock_pallas(x, w1, b1, w2, b2))
    assert out.shape == (N, DIM, L)
    err = jnp.max(jnp.abs(out - ref))
    assert jnp.allclose(out, ref, rtol=1e-5, atol=1e-5), \
        f"f32 max abs err = {err}"

    # bf16-MXU-operand path (v6e/v7x throughput mode); accumulation stays f32.
    out_bf = jax.block_until_ready(
        resblock_pallas(x, w1, b1, w2, b2, compute_dtype=jnp.bfloat16))
    err_bf = jnp.max(jnp.abs(out_bf - ref))
    assert jnp.allclose(out_bf, ref, rtol=5e-2, atol=5e-2), \
        f"bf16 max abs err = {err_bf}"

    print("KERNEL_OK")
</pallas_src>

<mosaic_0001>
module attributes {stable_mosaic.version = 11 : i64} {
  func.func @resblock_kernel(%arg0: i32, %arg1: memref<1x16x128xf32, #tpu.memory_space<vmem>>, %arg2: memref<5x128x128xf32, #tpu.memory_space<vmem>>, %arg3: memref<1x128xf32, #tpu.memory_space<vmem>>, %arg4: memref<5x128x128xf32, #tpu.memory_space<vmem>>, %arg5: memref<1x128xf32, #tpu.memory_space<vmem>>, %arg6: memref<1x16x128xf32, #tpu.memory_space<vmem>>, %arg7: memref<40x128xf32, #tpu.memory_space<vmem>>, %arg8: memref<24x128xf32, #tpu.memory_space<vmem>>) attributes {dimension_semantics = [#tpu.dimension_semantics<parallel>], iteration_bounds = array<i64: 2>, scalar_prefetch = 0 : i64, scratch_operands = 2 : i64, tpu.core_type = #tpu.core_type<tc>, window_params = [{transform_indices = @transform_0, window_bounds = array<i64: 1, 16, 128>}, {pipeline_mode = #tpu.pipeline_mode<synchronous>, transform_indices = @transform_1, window_bounds = array<i64: 5, 128, 128>}, {pipeline_mode = #tpu.pipeline_mode<synchronous>, transform_indices = @transform_2, window_bounds = array<i64: 1, 128>}, {pipeline_mode = #tpu.pipeline_mode<synchronous>, transform_indices = @transform_3, window_bounds = array<i64: 5, 128, 128>}, {pipeline_mode = #tpu.pipeline_mode<synchronous>, transform_indices = @transform_4, window_bounds = array<i64: 1, 128>}, {transform_indices = @transform_5, window_bounds = array<i64: 1, 16, 128>}]} {
    %cst = arith.constant 0.000000e+00 : f32
    %0 = vector.broadcast %cst : f32 to vector<8x128xf32>
    %cst_0 = arith.constant 0.000000e+00 : f32
    %1 = vector.broadcast %cst_0 : f32 to vector<8x128xf32>
    %c0 = arith.constant 0 : index
    %c0_1 = arith.constant 0 : index
    %2 = vector.load %arg7[%c0, %c0_1] : memref<40x128xf32, #tpu.memory_space<vmem>>, vector<8x128xf32>
    tpu.vector_store %arg7[%c0, %c0_1], %0 {strides = array<i32>} : memref<40x128xf32, #tpu.memory_space<vmem>>, vector<8x128xf32>,
    %c24 = arith.constant 24 : index
    %c0_2 = arith.constant 0 : index
    %3 = vector.load %arg7[%c24, %c0_2] : memref<40x128xf32, #tpu.memory_space<vmem>>, vector<8x128xf32>
    tpu.vector_store %arg7[%c24, %c0_2], %1 {strides = array<i32>} : memref<40x128xf32, #tpu.memory_space<vmem>>, vector<8x128xf32>,
    %c32 = arith.constant 32 : index
    %c0_3 = arith.constant 0 : index
    %4 = vector.load %arg7[%c32, %c0_3] : memref<40x128xf32, #tpu.memory_space<vmem>>, vector<8x128xf32>
    tpu.vector_store %arg7[%c32, %c0_3], %0 {strides = array<i32>} : memref<40x128xf32, #tpu.memory_space<vmem>>, vector<8x128xf32>,
    %c0_4 = arith.constant 0 : index
    %c0_5 = arith.constant 0 : index
    %c0_6 = arith.constant 0 : index
    %5 = vector.load %arg1[%c0_4, %c0_5, %c0_6] : memref<1x16x128xf32, #tpu.memory_space<vmem>>, vector<1x16x128xf32>
    %6 = vector.shape_cast %5 : vector<1x16x128xf32> to vector<16x128xf32>
    %cst_7 = arith.constant 0.000000e+00 : f32
    %7 = vector.broadcast %cst_7 : f32 to vector<16x128xf32>
    %8 = arith.maximumf %6, %7 : vector<16x128xf32>
    %c8 = arith.constant 8 : index
    %c0_8 = arith.constant 0 : index
    %9 = vector.load %arg7[%c8, %c0_8] : memref<40x128xf32, #tpu.memory_space<vmem>>, vector<16x128xf32>
    tpu.vector_store %arg7[%c8, %c0_8], %8 {strides = array<i32>} : memref<40x128xf32, #tpu.memory_space<vmem>>, vector<16x128xf32>,
    %c0_9 = arith.constant 0 : index
    %c0_10 = arith.constant 0 : index
    %10 = vector.load %arg3[%c0_9, %c0_10] : memref<1x128xf32, #tpu.memory_space<vmem>>, vector<1x128xf32>
    %11 = vector.shape_cast %10 : vector<1x128xf32> to vector<1x128xf32>
    %12 = vector.broadcast %11 : vector<1x128xf32> to vector<24x128xf32>
    %c0_11 = arith.constant 0 : index
    %c0_12 = arith.constant 0 : index
    %13 = vector.load %arg8[%c0_11, %c0_12] : memref<24x128xf32, #tpu.memory_space<vmem>>, vector<24x128xf32>
    tpu.vector_store %arg8[%c0_11, %c0_12], %12 {strides = array<i32>} : memref<24x128xf32, #tpu.memory_space<vmem>>, vector<24x128xf32>,
    %c0_13 = arith.constant 0 : index
    %c0_14 = arith.constant 0 : index
    %14 = vector.load %arg8[%c0_13, %c0_14] : memref<24x128xf32, #tpu.memory_space<vmem>>, vector<24x128xf32>
    %c6 = arith.constant 6 : index
    %c0_15 = arith.constant 0 : index
    %15 = vector.load %arg7[%c6, %c0_15] : memref<40x128xf32, #tpu.memory_space<vmem>>, vector<24x128xf32>
    %c0_16 = arith.constant 0 : index
    %c0_17 = arith.constant 0 : index
    %c0_18 = arith.constant 0 : index
    %16 = vector.load %arg2[%c0_16, %c0_17, %c0_18] : memref<5x128x128xf32, #tpu.memory_space<vmem>>, vector<1x128x128xf32>
    %17 = vector.shape_cast %16 : vector<1x128x128xf32> to vector<128x128xf32>
    %cst_19 = arith.constant dense<0.000000e+00> : vector<24x128xf32>
    %18 = tpu.matmul %15, %17, %cst_19 {dimension_numbers = #tpu.dot_dimension_numbers<[1], [0], [0], [1], [0, 0, 1, 1], [], []>} : vector<24x128xf32>, vector<128x128xf32>, vector<24x128xf32> -> vector<24x128xf32>
    %19 = arith.addf %14, %18 : vector<24x128xf32>
    %c0_20 = arith.constant 0 : index
    %c0_21 = arith.constant 0 : index
    %20 = vector.load %arg8[%c0_20, %c0_21] : memref<24x128xf32, #tpu.memory_space<vmem>>, vector<24x128xf32>
    tpu.vector_store %arg8[%c0_20, %c0_21], %19 {strides = array<i32>} : memref<24x128xf32, #tpu.memory_space<vmem>>, vector<24x128xf32>,
    %c0_22 = arith.constant 0 : index
    %c0_23 = arith.constant 0 : index
    %21 = vector.load %arg8[%c0_22, %c0_23] : memref<24x128xf32, #tpu.memory_space<vmem>>, vector<24x128xf32>
    %c7 = arith.constant 7 : index
    %c0_24 = arith.constant 0 : index
    %22 = vector.load %arg7[%c7, %c0_24] : memref<40x128xf32, #tpu.memory_space<vmem>>, vector<24x128xf32>
    %c1 = arith.constant 1 : index
    %c0_25 = arith.constant 0 : index
    %c0_26 = arith.constant 0 : index
    %23 = vector.load %arg2[%c1, %c0_25, %c0_26] : memref<5x128x128xf32, #tpu.memory_space<vmem>>, vector<1x128x128xf32>
    %24 = vector.shape_cast %23 : vector<1x128x128xf32> to vector<128x128xf32>
    %cst_27 = arith.constant dense<0.000000e+00> : vector<24x128xf32>
    %25 = tpu.matmul %22, %24, %cst_27 {dimension_numbers = #tpu.dot_dimension_numbers<[1], [0], [0], [1], [0, 0, 1, 1], [], []>} : vector<24x128xf32>, vector<128x128xf32>, vector<24x128xf32> -> vector<24x128xf32>
    %26 = arith.addf %21, %25 : vector<24x128xf32>
    %c0_28 = arith.constant 0 : index
    %c0_29 = arith.constant 0 : index
    %27 = vector.load %arg8[%c0_28, %c0_29] : memref<24x128xf32, #tpu.memory_space<vmem>>, vector<24x128xf32>
    tpu.vector_store %arg8[%c0_28, %c0_29], %26 {strides = array<i32>} : memref<24x128xf32, #tpu.memory_space<vmem>>, vector<24x128xf32>,
    %c0_30 = arith.constant 0 : index
    %c0_31 = arith.constant 0 : index
    %28 = vector.load %arg8[%c0_30, %c0_31] : memref<24x128xf32, #tpu.memory_space<vmem>>, vector<24x128xf32>
    %c8_32 = arith.constant 8 : index
    %c0_33 = arith.constant 0 : index
    %29 = vector.load %arg7[%c8_32, %c0_33] : memref<40x128xf32, #tpu.memory_space<vmem>>, vector<24x128xf32>
    %c2 = arith.constant 2 : index
    %c0_34 = arith.constant 0 : index
    %c0_35 = arith.constant 0 : index
    %30 = vector.load %arg2[%c2, %c0_34, %c0_35] : memref<5x128x128xf32, #tpu.memory_space<vmem>>, vector<1x128x128xf32>
    %31 = vector.shape_cast %30 : vector<1x128x128xf32> to vector<128x128xf32>
    %cst_36 = arith.constant dense<0.000000e+00> : vector<24x128xf32>
    %32 = tpu.matmul %29, %31, %cst_36 {dimension_numbers = #tpu.dot_dimension_numbers<[1], [0], [0], [1], [0, 0, 1, 1], [], []>} : vector<24x128xf32>, vector<128x128xf32>, vector<24x128xf32> -> vector<24x128xf32>
    %33 = arith.addf %28, %32 : vector<24x128xf32>
    %c0_37 = arith.constant 0 : index
    %c0_38 = arith.constant 0 : index
    %34 = vector.load %arg8[%c0_37, %c0_38] : memref<24x128xf32, #tpu.memory_space<vmem>>, vector<24x128xf32>
    tpu.vector_store %arg8[%c0_37, %c0_38], %33 {strides = array<i32>} : memref<24x128xf32, #tpu.memory_space<vmem>>, vector<24x128xf32>,
    %c0_39 = arith.constant 0 : index
    %c0_40 = arith.constant 0 : index
    %35 = vector.load %arg8[%c0_39, %c0_40] : memref<24x128xf32, #tpu.memory_space<vmem>>, vector<24x128xf32>
    %c9 = arith.constant 9 : index
    %c0_41 = arith.constant 0 : index
    %36 = vector.load %arg7[%c9, %c0_41] : memref<40x128xf32, #tpu.memory_space<vmem>>, vector<24x128xf32>
    %c3 = arith.constant 3 : index
    %c0_42 = arith.constant 0 : index
    %c0_43 = arith.constant 0 : index
    %37 = vector.load %arg2[%c3, %c0_42, %c0_43] : memref<5x128x128xf32, #tpu.memory_space<vmem>>, vector<1x128x128xf32>
    %38 = vector.shape_cast %37 : vector<1x128x128xf32> to vector<128x128xf32>
    %cst_44 = arith.constant dense<0.000000e+00> : vector<24x128xf32>
    %39 = tpu.matmul %36, %38, %cst_44 {dimension_numbers = #tpu.dot_dimension_numbers<[1], [0], [0], [1], [0, 0, 1, 1], [], []>} : vector<24x128xf32>, vector<128x128xf32>, vector<24x128xf32> -> vector<24x128xf32>
    %40 = arith.addf %35, %39 : vector<24x128xf32>
    %c0_45 = arith.constant 0 : index
    %c0_46 = arith.constant 0 : index
    %41 = vector.load %arg8[%c0_45, %c0_46] : memref<24x128xf32, #tpu.memory_space<vmem>>, vector<24x128xf32>
    tpu.vector_store %arg8[%c0_45, %c0_46], %40 {strides = array<i32>} : memref<24x128xf32, #tpu.memory_space<vmem>>, vector<24x128xf32>,
    %c0_47 = arith.constant 0 : index
    %c0_48 = arith.constant 0 : index
    %42 = vector.load %arg8[%c0_47, %c0_48] : memref<24x128xf32, #tpu.memory_space<vmem>>, vector<24x128xf32>
    %c10 = arith.constant 10 : index
    %c0_49 = arith.constant 0 : index
    %43 = vector.load %arg7[%c10, %c0_49] : memref<40x128xf32, #tpu.memory_space<vmem>>, vector<24x128xf32>
    %c4 = arith.constant 4 : index
    %c0_50 = arith.constant 0 : index
    %c0_51 = arith.constant 0 : index
    %44 = vector.load %arg2[%c4, %c0_50, %c0_51] : memref<5x128x128xf32, #tpu.memory_space<vmem>>, vector<1x128x128xf32>
    %45 = vector.shape_cast %44 : vector<1x128x128xf32> to vector<128x128xf32>
    %cst_52 = arith.constant dense<0.000000e+00> : vector<24x128xf32>
    %46 = tpu.matmul %43, %45, %cst_52 {dimension_numbers = #tpu.dot_dimension_numbers<[1], [0], [0], [1], [0, 0, 1, 1], [], []>} : vector<24x128xf32>, vector<128x128xf32>, vector<24x128xf32> -> vector<24x128xf32>
    %47 = arith.addf %42, %46 : vector<24x128xf32>
    %c0_53 = arith.constant 0 : index
    %c0_54 = arith.constant 0 : index
    %48 = vector.load %arg8[%c0_53, %c0_54] : memref<24x128xf32, #tpu.memory_space<vmem>>, vector<24x128xf32>
    tpu.vector_store %arg8[%c0_53, %c0_54], %47 {strides = array<i32>} : memref<24x128xf32, #tpu.memory_space<vmem>>, vector<24x128xf32>,
    %c0_55 = arith.constant 0 : index
    %c0_56 = arith.constant 0 : index
    %49 = vector.load %arg8[%c0_55, %c0_56] : memref<24x128xf32, #tpu.memory_space<vmem>>, vector<16x128xf32>
    %cst_57 = arith.constant 0.000000e+00 : f32
    %50 = vector.broadcast %cst_57 : f32 to vector<16x128xf32>
    %51 = arith.maximumf %49, %50 : vector<16x128xf32>
    %c8_58 = arith.constant 8 : index
    %c0_59 = arith.constant 0 : index
    %52 = vector.load %arg7[%c8_58, %c0_59] : memref<40x128xf32, #tpu.memory_space<vmem>>, vector<16x128xf32>
    tpu.vector_store %arg7[%c8_58, %c0_59], %51 {strides = array<i32>} : memref<40x128xf32, #tpu.memory_space<vmem>>, vector<16x128xf32>,
    %c0_60 = arith.constant 0 : index
    %c0_61 = arith.constant 0 : index
    %53 = vector.load %arg5[%c0_60, %c0_61] : memref<1x128xf32, #tpu.memory_space<vmem>>, vector<1x128xf32>
    %54 = vector.shape_cast %53 : vector<1x128xf32> to vector<1x128xf32>
    %55 = vector.broadcast %54 : vector<1x128xf32> to vector<24x128xf32>
    %c0_62 = arith.constant 0 : index
    %c0_63 = arith.constant 0 : index
    %56 = vector.load %arg8[%c0_62, %c0_63] : memref<24x128xf32, #tpu.memory_space<vmem>>, vector<24x128xf32>
    tpu.vector_store %arg8[%c0_62, %c0_63], %55 {strides = array<i32>} : memref<24x128xf32, #tpu.memory_space<vmem>>, vector<24x128xf32>,
    %c0_64 = arith.constant 0 : index
    %c0_65 = arith.constant 0 : index
    %57 = vector.load %arg8[%c0_64, %c0_65] : memref<24x128xf32, #tpu.memory_space<vmem>>, vector<24x128xf32>
    %c6_66 = arith.constant 6 : index
    %c0_67 = arith.constant 0 : index
    %58 = vector.load %arg7[%c6_66, %c0_67] : memref<40x128xf32, #tpu.memory_space<vmem>>, vector<24x128xf32>
    %c0_68 = arith.constant 0 : index
    %c0_69 = arith.constant 0 : index
    %c0_70 = arith.constant 0 : index
    %59 = vector.load %arg4[%c0_68, %c0_69, %c0_70] : memref<5x128x128xf32, #tpu.memory_space<vmem>>, vector<1x128x128xf32>
    %60 = vector.shape_cast %59 : vector<1x128x128xf32> to vector<128x128xf32>
    %cst_71 = arith.constant dense<0.000000e+00> : vector<24x128xf32>
    %61 = tpu.matmul %58, %60, %cst_71 {dimension_numbers = #tpu.dot_dimension_numbers<[1], [0], [0], [1], [0, 0, 1, 1], [], []>} : vector<24x128xf32>, vector<128x128xf32>, vector<24x128xf32> -> vector<24x128xf32>
    %62 = arith.addf %57, %61 : vector<24x128xf32>
    %c0_72 = arith.constant 0 : index
    %c0_73 = arith.constant 0 : index
    %63 = vector.load %arg8[%c0_72, %c0_73] : memref<24x128xf32, #tpu.memory_space<vmem>>, vector<24x128xf32>
    tpu.vector_store %arg8[%c0_72, %c0_73], %62 {strides = array<i32>} : memref<24x128xf32, #tpu.memory_space<vmem>>, vector<24x128xf32>,
    %c0_74 = arith.constant 0 : index
    %c0_75 = arith.constant 0 : index
    %64 = vector.load %arg8[%c0_74, %c0_75] : memref<24x128xf32, #tpu.memory_space<vmem>>, vector<24x128xf32>
    %c7_76 = arith.constant 7 : index
    %c0_77 = arith.constant 0 : index
    %65 = vector.load %arg7[%c7_76, %c0_77] : memref<40x128xf32, #tpu.memory_space<vmem>>, vector<24x128xf32>
    %c1_78 = arith.constant 1 : index
    %c0_79 = arith.constant 0 : index
    %c0_80 = arith.constant 0 : index
    %66 = vector.load %arg4[%c1_78, %c0_79, %c0_80] : memref<5x128x128xf32, #tpu.memory_space<vmem>>, vector<1x128x128xf32>
    %67 = vector.shape_cast %66 : vector<1x128x128xf32> to vector<128x128xf32>
    %cst_81 = arith.constant dense<0.000000e+00> : vector<24x128xf32>
    %68 = tpu.matmul %65, %67, %cst_81 {dimension_numbers = #tpu.dot_dimension_numbers<[1], [0], [0], [1], [0, 0, 1, 1], [], []>} : vector<24x128xf32>, vector<128x128xf32>, vector<24x128xf32> -> vector<24x128xf32>
    %69 = arith.addf %64, %68 : vector<24x128xf32>
    %c0_82 = arith.constant 0 : index
    %c0_83 = arith.constant 0 : index
    %70 = vector.load %arg8[%c0_82, %c0_83] : memref<24x128xf32, #tpu.memory_space<vmem>>, vector<24x128xf32>
    tpu.vector_store %arg8[%c0_82, %c0_83], %69 {strides = array<i32>} : memref<24x128xf32, #tpu.memory_space<vmem>>, vector<24x128xf32>,
    %c0_84 = arith.constant 0 : index
    %c0_85 = arith.constant 0 : index
    %71 = vector.load %arg8[%c0_84, %c0_85] : memref<24x128xf32, #tpu.memory_space<vmem>>, vector<24x128xf32>
    %c8_86 = arith.constant 8 : index
    %c0_87 = arith.constant 0 : index
    %72 = vector.load %arg7[%c8_86, %c0_87] : memref<40x128xf32, #tpu.memory_space<vmem>>, vector<24x128xf32>
    %c2_88 = arith.constant 2 : index
    %c0_89 = arith.constant 0 : index
    %c0_90 = arith.constant 0 : index
    %73 = vector.load %arg4[%c2_88, %c0_89, %c0_90] : memref<5x128x128xf32, #tpu.memory_space<vmem>>, vector<1x128x128xf32>
    %74 = vector.shape_cast %73 : vector<1x128x128xf32> to vector<128x128xf32>
    %cst_91 = arith.constant dense<0.000000e+00> : vector<24x128xf32>
    %75 = tpu.matmul %72, %74, %cst_91 {dimension_numbers = #tpu.dot_dimension_numbers<[1], [0], [0], [1], [0, 0, 1, 1], [], []>} : vector<24x128xf32>, vector<128x128xf32>, vector<24x128xf32> -> vector<24x128xf32>
    %76 = arith.addf %71, %75 : vector<24x128xf32>
    %c0_92 = arith.constant 0 : index
    %c0_93 = arith.constant 0 : index
    %77 = vector.load %arg8[%c0_92, %c0_93] : memref<24x128xf32, #tpu.memory_space<vmem>>, vector<24x128xf32>
    tpu.vector_store %arg8[%c0_92, %c0_93], %76 {strides = array<i32>} : memref<24x128xf32, #tpu.memory_space<vmem>>, vector<24x128xf32>,
    %c0_94 = arith.constant 0 : index
    %c0_95 = arith.constant 0 : index
    %78 = vector.load %arg8[%c0_94, %c0_95] : memref<24x128xf32, #tpu.memory_space<vmem>>, vector<24x128xf32>
    %c9_96 = arith.constant 9 : index
    %c0_97 = arith.constant 0 : index
    %79 = vector.load %arg7[%c9_96, %c0_97] : memref<40x128xf32, #tpu.memory_space<vmem>>, vector<24x128xf32>
    %c3_98 = arith.constant 3 : index
    %c0_99 = arith.constant 0 : index
    %c0_100 = arith.constant 0 : index
    %80 = vector.load %arg4[%c3_98, %c0_99, %c0_100] : memref<5x128x128xf32, #tpu.memory_space<vmem>>, vector<1x128x128xf32>
    %81 = vector.shape_cast %80 : vector<1x128x128xf32> to vector<128x128xf32>
    %cst_101 = arith.constant dense<0.000000e+00> : vector<24x128xf32>
    %82 = tpu.matmul %79, %81, %cst_101 {dimension_numbers = #tpu.dot_dimension_numbers<[1], [0], [0], [1], [0, 0, 1, 1], [], []>} : vector<24x128xf32>, vector<128x128xf32>, vector<24x128xf32> -> vector<24x128xf32>
    %83 = arith.addf %78, %82 : vector<24x128xf32>
    %c0_102 = arith.constant 0 : index
    %c0_103 = arith.constant 0 : index
    %84 = vector.load %arg8[%c0_102, %c0_103] : memref<24x128xf32, #tpu.memory_space<vmem>>, vector<24x128xf32>
    tpu.vector_store %arg8[%c0_102, %c0_103], %83 {strides = array<i32>} : memref<24x128xf32, #tpu.memory_space<vmem>>, vector<24x128xf32>,
    %c0_104 = arith.constant 0 : index
    %c0_105 = arith.constant 0 : index
    %85 = vector.load %arg8[%c0_104, %c0_105] : memref<24x128xf32, #tpu.memory_space<vmem>>, vector<24x128xf32>
    %c10_106 = arith.constant 10 : index
    %c0_107 = arith.constant 0 : index
    %86 = vector.load %arg7[%c10_106, %c0_107] : memref<40x128xf32, #tpu.memory_space<vmem>>, vector<24x128xf32>
    %c4_108 = arith.constant 4 : index
    %c0_109 = arith.constant 0 : index
    %c0_110 = arith.constant 0 : index
    %87 = vector.load %arg4[%c4_108, %c0_109, %c0_110] : memref<5x128x128xf32, #tpu.memory_space<vmem>>, vector<1x128x128xf32>
    %88 = vector.shape_cast %87 : vector<1x128x128xf32> to vector<128x128xf32>
    %cst_111 = arith.constant dense<0.000000e+00> : vector<24x128xf32>
    %89 = tpu.matmul %86, %88, %cst_111 {dimension_numbers = #tpu.dot_dimension_numbers<[1], [0], [0], [1], [0, 0, 1, 1], [], []>} : vector<24x128xf32>, vector<128x128xf32>, vector<24x128xf32> -> vector<24x128xf32>
    %90 = arith.addf %85, %89 : vector<24x128xf32>
    %c0_112 = arith.constant 0 : index
    %c0_113 = arith.constant 0 : index
    %91 = vector.load %arg8[%c0_112, %c0_113] : memref<24x128xf32, #tpu.memory_space<vmem>>, vector<24x128xf32>
    tpu.vector_store %arg8[%c0_112, %c0_113], %90 {strides = array<i32>} : memref<24x128xf32, #tpu.memory_space<vmem>>, vector<24x128xf32>,
    %c0_114 = arith.constant 0 : index
    %c0_115 = arith.constant 0 : index
    %c0_116 = arith.constant 0 : index
    %92 = vector.load %arg1[%c0_114, %c0_115, %c0_116] : memref<1x16x128xf32, #tpu.memory_space<vmem>>, vector<1x16x128xf32>
    %93 = vector.shape_cast %92 : vector<1x16x128xf32> to vector<16x128xf32>
    %c0_117 = arith.constant 0 : index
    %c0_118 = arith.constant 0 : index
    %94 = vector.load %arg8[%c0_117, %c0_118] : memref<24x128xf32, #tpu.memory_space<vmem>>, vector<16x128xf32>
    %95 = arith.addf %93, %94 : vector<16x128xf32>
    %c0_119 = arith.constant 0 : index
    %c0_120 = arith.constant 0 : index
    %c0_121 = arith.constant 0 : index
    %96 = vector.load %arg6[%c0_119, %c0_120, %c0_121] : memref<1x16x128xf32, #tpu.memory_space<vmem>>, vector<1x16x128xf32>
    %97 = vector.shape_cast %96 : vector<1x16x128xf32> to vector<16x128xf32>
    %98 = vector.shape_cast %95 : vector<16x128xf32> to vector<1x16x128xf32>
    tpu.vector_store %arg6[%c0_119, %c0_120, %c0_121], %98 {strides = array<i32>} : memref<1x16x128xf32, #tpu.memory_space<vmem>>, vector<1x16x128xf32>,
    return
  }
  func.func @transform_0(%arg0: i32) -> (i32, i32, i32) {
    %c0_i32 = arith.constant 0 : i32
    %c0_i32_0 = arith.constant 0 : i32
    %c0_i32_1 = arith.constant 0 : i32
    return %arg0, %c0_i32, %c0_i32_0 : i32, i32, i32
  }
  func.func @transform_1(%arg0: i32) -> (i32, i32, i32) {
    %c0_i32 = arith.constant 0 : i32
    %c0_i32_0 = arith.constant 0 : i32
    %c0_i32_1 = arith.constant 0 : i32
    %c0_i32_2 = arith.constant 0 : i32
    return %c0_i32, %c0_i32_0, %c0_i32_1 : i32, i32, i32
  }
  func.func @transform_2(%arg0: i32) -> (i32, i32) {
    %c0_i32 = arith.constant 0 : i32
    %c0_i32_0 = arith.constant 0 : i32
    %c0_i32_1 = arith.constant 0 : i32
    return %c0_i32, %c0_i32_0 : i32, i32
  }
  func.func @transform_3(%arg0: i32) -> (i32, i32, i32) {
    %c0_i32 = arith.constant 0 : i32
    %c0_i32_0 = arith.constant 0 : i32
    %c0_i32_1 = arith.constant 0 : i32
    %c0_i32_2 = arith.constant 0 : i32
    return %c0_i32, %c0_i32_0, %c0_i32_1 : i32, i32, i32
  }
  func.func @transform_4(%arg0: i32) -> (i32, i32) {
    %c0_i32 = arith.constant 0 : i32
    %c0_i32_0 = arith.constant 0 : i32
    %c0_i32_1 = arith.constant 0 : i32
    return %c0_i32, %c0_i32_0 : i32, i32
  }
  func.func @transform_5(%arg0: i32) -> (i32, i32, i32) {
    %c0_i32 = arith.constant 0 : i32
    %c0_i32_0 = arith.constant 0 : i32
    %c0_i32_1 = arith.constant 0 : i32
    return %arg0, %c0_i32, %c0_i32_0 : i32, i32, i32
  }
}

</mosaic_0001>

<llo_original>
// kernel: tpu_custom_call.1
$region0: #{tpu_custom_call.1}
  #allocation0 [shape = 'u32[]', space=smem, size = 0x4, offset = 0x4, fixed_abs, tag = 'smem constant byte address 0x4 - core index']
  #allocation1 [shape = 'u32[72,128]{1,0:T(1,128)}', space=vmem, size = 0x9000, scoped, tag = 'internal scratch']
  #allocation2 [shape = 'f32[40,128]{1,0:T(8,128)}', space=vmem, size = 0x5000, scoped, tag = 'scratch operand']
  #allocation3 [shape = 'f32[24,128]{1,0:T(8,128)}', space=vmem, size = 0x3000, scoped, tag = 'scratch operand']
  %s0 = inlined_call_operand.hbm [shape: f32[2,16,128], index: 0, kind: input, shape index: {}]
  %s1 = inlined_call_operand.hbm [shape: f32[5,128,128], index: 1, kind: input, shape index: {}]
  %s2 = inlined_call_operand.vmem [shape: f32[1,128], index: 2, kind: input, shape index: {}]
  %s3 = inlined_call_operand.hbm [shape: f32[5,128,128], index: 3, kind: input, shape index: {}]
  %s4 = inlined_call_operand.vmem [shape: f32[1,128], index: 4, kind: input, shape index: {}]
  %s5 = inlined_call_operand.hbm [shape: f32[2,16,128], index: 5, kind: output, shape index: {}]
  %s6 = sld [smem:[#allocation0]]
  $region65: #{tpu_custom_call.1} parent=0
    _
  %s8 = ssub.s32 1, %s6
  %s9 = scalar_select 0, %s8, %s6
  $region1: #{tpu_custom_call.1} parent=0
    #allocation4 [shape = 'u8[16384]{0}', space=vmem, size = 0x4000, scoped, tag = 'input window, operand 0']
    #allocation5 [shape = 's32[2]{0}', space=sflag, size = 0x8, scoped, tag = 'scoped memory for tpu_custom_call.1']
    #allocation6 [shape = 's32[2]{0}', space=sflag, size = 0x8, scoped, tag = 'scoped memory for tpu_custom_call.1']
    #allocation7 [shape = 'u8[327680]{0}', space=vmem, size = 0x50000, scoped, tag = 'input window, operand 1, single buffered']
    #allocation8 [shape = 's32[1]{0}', space=sflag, size = 0x4, scoped, tag = 'scoped memory for tpu_custom_call.1']
    #allocation9 [shape = 'u8[327680]{0}', space=vmem, size = 0x50000, scoped, tag = 'input window, operand 3, single buffered']
    #allocation10 [shape = 'u8[16384]{0}', space=vmem, size = 0x4000, scoped, tag = 'output window, operand 0']
    %10 = vsyncpa [#allocation5], 0
    %s11 = scalar_lea.sflag [#allocation5], 1
    %12 = vsyncpa %s11, 0
    %13 = vsyncpa [#allocation8], 0
    %14 = vsyncpa [#allocation6], 0
    %s15 = scalar_lea.sflag [#allocation6], 1
    %16 = vsyncpa %s15, 0
    loop: start=0, step=1, limit=4
    $region2: #{tpu_custom_call.1} parent=1 // loop_pre_header
      _
    $region3: #{tpu_custom_call.1} parent=1 // loop_header
      %s18 = sphi 0, %s22
      %p19 = scmp.ge.s32.totalorder %s18, 4
      %s28 = sphi 0, %s30
      %s31 = sphi 0, %s28
      %s32 = sphi 0, %s31
      %s48 = sphi 0, %s32
      %s52 = sphi 0, %s52
      %s54 = sphi 0, %s52
      %s55 = sphi 0, %s54
      %s69 = sphi 0, %s55
      %s73 = sphi 0, %s73
      %s75 = sphi 0, %s73
      %s76 = sphi 0, %s75
      %s90 = sphi 0, %s76
      %s94 = sphi 0, %s94
      %s96 = sphi 0, %s94
      %s97 = sphi 0, %s96
      %s111 = sphi 0, %s97
      %s115 = sphi 0, %s115
      %s117 = sphi 0, %s115
      %s118 = sphi 0, %s117
      %s132 = sphi 0, %s118
      %s138 = sphi 0, %s140
      %s141 = sphi 0, %s138
      %s142 = sphi 0, %s141
      %s158 = sphi 0, %s142
    $region4: #{tpu_custom_call.1} parent=1 // loop_header_branch
      %21 = sbr.rel (%p19) target = $region8
    $region5: #{tpu_custom_call.1} parent=1 // loop_body
      %s23 = ssub.s32 %s18, 1
      %s24 = ssub.s32 %s18, 2
      %s25 = sadd.s32 %s18, 1
      %s26 = ssub.s32 %s18, %s25
      %p27 = scmp.eq.s32.totalorder %s26, 0
      %s29 = sadd.s32 %s28, 1
      %s30 = scalar_select %p27, %s28, %s29
      %p33 = pneg %p27
      %p34 = scmp.eq.s32.totalorder %s18, 1
      %p35 = por %p33, %p34
      %p36 = scmp.ne.s32.totalorder %s28, %s31
      %p37 = scmp.eq.s32.totalorder %s18, 0
      %p38 = por %p36, %p37
      %p39 = scmp.ne.s32.totalorder %s28, %s31
      %p40 = scmp.eq.s32.totalorder %s23, 1
      %p41 = por %p39, %p40
      %p42 = scmp.ne.s32.totalorder %s31, %s32
      %p43 = scmp.eq.s32.totalorder %s23, 0
      %p44 = por %p42, %p43
      %p45 = scmp.ne.s32.totalorder %s31, %s32
      %p46 = scmp.eq.s32.totalorder %s24, 1
      %p47 = por %p45, %p46
      %p49 = scmp.ne.s32.totalorder %s32, %s48
      %p50 = scmp.eq.s32.totalorder %s24, 0
      %p51 = por %p49, %p50
      %s53 = sadd.s32 %s52, 1
      %p56 = scmp.eq.s32.totalorder %s18, 1
      %p57 = scmp.ne.s32.totalorder %s52, %s54
      %p58 = scmp.eq.s32.totalorder %s18, 0
      %p59 = por %p57, %p58
      %p60 = scmp.ne.s32.totalorder %s52, %s54
      %p61 = scmp.eq.s32.totalorder %s23, 1
      %p62 = por %p60, %p61
      %p63 = scmp.ne.s32.totalorder %s54, %s55
      %p64 = scmp.eq.s32.totalorder %s23, 0
      %p65 = por %p63, %p64
      %p66 = scmp.ne.s32.totalorder %s54, %s55
      %p67 = scmp.eq.s32.totalorder %s24, 1
      %p68 = por %p66, %p67
      %p70 = scmp.ne.s32.totalorder %s55, %s69
      %p71 = scmp.eq.s32.totalorder %s24, 0
      %p72 = por %p70, %p71
      %s74 = sadd.s32 %s73, 1
      %p77 = scmp.eq.s32.totalorder %s18, 1
      %p78 = scmp.ne.s32.totalorder %s73, %s75
      %p79 = scmp.eq.s32.totalorder %s18, 0
      %p80 = por %p78, %p79
      %p81 = scmp.ne.s32.totalorder %s73, %s75
      %p82 = scmp.eq.s32.totalorder %s23, 1
      %p83 = por %p81, %p82
      %p84 = scmp.ne.s32.totalorder %s75, %s76
      %p85 = scmp.eq.s32.totalorder %s23, 0
      %p86 = por %p84, %p85
      %p87 = scmp.ne.s32.totalorder %s75, %s76
      %p88 = scmp.eq.s32.totalorder %s24, 1
      %p89 = por %p87, %p88
      %p91 = scmp.ne.s32.totalorder %s76, %s90
      %p92 = scmp.eq.s32.totalorder %s24, 0
      %p93 = por %p91, %p92
      %s95 = sadd.s32 %s94, 1
      %p98 = scmp.eq.s32.totalorder %s18, 1
      %p99 = scmp.ne.s32.totalorder %s94, %s96
      %p100 = scmp.eq.s32.totalorder %s18, 0
      %p101 = por %p99, %p100
      %p102 = scmp.ne.s32.totalorder %s94, %s96
      %p103 = scmp.eq.s32.totalorder %s23, 1
      %p104 = por %p102, %p103
      %p105 = scmp.ne.s32.totalorder %s96, %s97
      %p106 = scmp.eq.s32.totalorder %s23, 0
      %p107 = por %p105, %p106
      %p108 = scmp.ne.s32.totalorder %s96, %s97
      %p109 = scmp.eq.s32.totalorder %s24, 1
      %p110 = por %p108, %p109
      %p112 = scmp.ne.s32.totalorder %s97, %s111
      %p113 = scmp.eq.s32.totalorder %s24, 0
      %p114 = por %p112, %p113
      %s116 = sadd.s32 %s115, 1
      %p119 = scmp.eq.s32.totalorder %s18, 1
      %p120 = scmp.ne.s32.totalorder %s115, %s117
      %p121 = scmp.eq.s32.totalorder %s18, 0
      %p122 = por %p120, %p121
      %p123 = scmp.ne.s32.totalorder %s115, %s117
      %p124 = scmp.eq.s32.totalorder %s23, 1
      %p125 = por %p123, %p124
      %p126 = scmp.ne.s32.totalorder %s117, %s118
      %p127 = scmp.eq.s32.totalorder %s23, 0
      %p128 = por %p126, %p127
      %p129 = scmp.ne.s32.totalorder %s117, %s118
      %p130 = scmp.eq.s32.totalorder %s24, 1
      %p131 = por %p129, %p130
      %p133 = scmp.ne.s32.totalorder %s118, %s132
      %p134 = scmp.eq.s32.totalorder %s24, 0
      %p135 = por %p133, %p134
      %s136 = ssub.s32 %s18, %s25
      %p137 = scmp.eq.s32.totalorder %s136, 0
      %s139 = sadd.s32 %s138, 1
      %s140 = scalar_select %p137, %s138, %s139
      %p143 = pneg %p137
      %p144 = scmp.eq.s32.totalorder %s18, 1
      %p145 = por %p143, %p144
      %p146 = scmp.ne.s32.totalorder %s138, %s141
      %p147 = scmp.eq.s32.totalorder %s18, 0
      %p148 = por %p146, %p147
      %p149 = scmp.ne.s32.totalorder %s138, %s141
      %p150 = scmp.eq.s32.totalorder %s23, 1
      %p151 = por %p149, %p150
      %p152 = scmp.ne.s32.totalorder %s141, %s142
      %p153 = scmp.eq.s32.totalorder %s23, 0
      %p154 = por %p152, %p153
      %p155 = scmp.ne.s32.totalorder %s141, %s142
      %p156 = scmp.eq.s32.totalorder %s24, 1
      %p157 = por %p155, %p156
      %p159 = scmp.ne.s32.totalorder %s142, %s158
      %p160 = scmp.eq.s32.totalorder %s24, 0
      %p161 = por %p159, %p160
      %p162 = scmp.le.s32.totalorder 1, %s18
      %p163 = scmp.lt.s32.totalorder %s18, 3
      %p164 = pnand %p162, %p163
      %p165 = pneg %p164
      // Predicated region
      $region9: #{tpu_custom_call.1} parent=5 // pred_check
        _
      $region10: #{tpu_custom_call.1} parent=5 // pred_check_branch
        %167 = sbr.rel (%p164) target = $region12
      $region11: #{tpu_custom_call.1} parent=5 // pred_region
        %s168 = ssub.s32 %s18, 1
        // Predicated region
        $region13: #{tpu_custom_call.1} parent=11 // pred_check
          %p169 = pneg %p65
        $region14: #{tpu_custom_call.1} parent=11 // pred_check_branch
          %171 = sbr.rel (%p169) target = $region16
        $region15: #{tpu_custom_call.1} parent=11 // pred_region
          %173 = vsyncadd [#allocation8], 0
          %s174 = sshll.u32 %s1, 4
          %s175 = int_to_ptr.hbm [resolvable:$true] %s174
          %s176 = sshll.u32 [#allocation7], 4
          %s177 = int_to_ptr.vmem [resolvable:$true] %s176
          %182 = dma.hbm_to_vmem [thread:$0]  %s175, 10240, %s177, [#allocation8], 128, 128, 8
        $region16: #{tpu_custom_call.1} parent=11 // pred_fallthru
          _
        // Predicated region
        $region17: #{tpu_custom_call.1} parent=11 // pred_check
          %p183 = pneg %p86
        $region18: #{tpu_custom_call.1} parent=11 // pred_check_branch
          %185 = sbr.rel (%p183) target = $region20
        $region19: #{tpu_custom_call.1} parent=11 // pred_region
          _
        $region20: #{tpu_custom_call.1} parent=11 // pred_fallthru
          _
        // Predicated region
        $region21: #{tpu_custom_call.1} parent=11 // pred_check
          %p186 = pneg %p107
        $region22: #{tpu_custom_call.1} parent=11 // pred_check_branch
          %188 = sbr.rel (%p186) target = $region24
        $region23: #{tpu_custom_call.1} parent=11 // pred_region
          %190 = vsyncadd [#allocation8], 0
          %s191 = sshll.u32 %s3, 4
          %s192 = int_to_ptr.hbm [resolvable:$true] %s191
          %s193 = sshll.u32 [#allocation9], 4
          %s194 = int_to_ptr.vmem [resolvable:$true] %s193
          %199 = dma.hbm_to_vmem [thread:$0]  %s192, 10240, %s194, [#allocation8], 128, 128, 8
        $region24: #{tpu_custom_call.1} parent=11 // pred_fallthru
          _
        // Predicated region
        $region25: #{tpu_custom_call.1} parent=11 // pred_check
          %p200 = pneg %p128
        $region26: #{tpu_custom_call.1} parent=11 // pred_check_branch
          %202 = sbr.rel (%p200) target = $region28
        $region27: #{tpu_custom_call.1} parent=11 // pred_region
          _
        $region28: #{tpu_custom_call.1} parent=11 // pred_fallthru
          _
      $region12: #{tpu_custom_call.1} parent=5 // pred_fallthru
        _
      %p203 = scmp.lt.s32.totalorder %s18, 2
      // Predicated region
      $region29: #{tpu_custom_call.1} parent=5 // pred_check
        %p204 = pneg %p203
      $region30: #{tpu_custom_call.1} parent=5 // pred_check_branch
        %206 = sbr.rel (%p204) target = $region32
      $region31: #{tpu_custom_call.1} parent=5 // pred_region
        // Predicated region
        $region33: #{tpu_custom_call.1} parent=31 // pred_check
          %p207 = pneg %p38
        $region34: #{tpu_custom_call.1} parent=31 // pred_check_branch
          %209 = sbr.rel (%p207) target = $region36
        $region35: #{tpu_custom_call.1} parent=31 // pred_region
          %s210 = sand.u32 %s28, 1
          %s211 = scalar_lea.sflag [#allocation5], %s210
          %s212 = sand.u32 %s28, 1
          %s213 = smul.addr %s212, 16
          %s214 = scalar_lea.vmem [#allocation4], %s213
          %216 = vsyncadd %s211, 0
          %s217 = smul.addr %s18, 2
          %s218 = smul.addr %s217, 8
          %s219 = scalar_lea.hbm %s0, %s218
          %s220 = sshll.u32 %s219, 4
          %s221 = int_to_ptr.hbm [resolvable:$true] %s220
          %s222 = sshll.u32 %s214, 4
          %s223 = int_to_ptr.vmem [resolvable:$true] %s222
          %228 = dma.hbm_to_vmem [thread:$0]  %s221, 256, %s223, %s211, 128, 128, 8
        $region36: #{tpu_custom_call.1} parent=31 // pred_fallthru
          _
      $region32: #{tpu_custom_call.1} parent=5 // pred_fallthru
        _
      %p229 = scmp.le.s32.totalorder 1, %s18
      %p230 = scmp.lt.s32.totalorder %s18, 3
      %p231 = pnand %p229, %p230
      %p232 = pneg %p231
      // Predicated region
      $region37: #{tpu_custom_call.1} parent=5 // pred_check
        _
      $region38: #{tpu_custom_call.1} parent=5 // pred_check_branch
        %234 = sbr.rel (%p231) target = $region40
      $region39: #{tpu_custom_call.1} parent=5 // pred_region
        %s235 = ssub.s32 %s18, 1
        %s236 = sand.u32 %s31, 1
        %s237 = scalar_lea.sflag [#allocation5], %s236
        %s238 = sand.u32 %s31, 1
        %s239 = smul.addr %s238, 16
        %s240 = scalar_lea.vmem [#allocation4], %s239
        // Predicated region
        $region41: #{tpu_custom_call.1} parent=39 // pred_check
          %p241 = pneg %p44
        $region42: #{tpu_custom_call.1} parent=39 // pred_check_branch
          %243 = sbr.rel (%p241) target = $region44
        $region43: #{tpu_custom_call.1} parent=39 // pred_region
          %245 = dma.done %s237, 256
        $region44: #{tpu_custom_call.1} parent=39 // pred_fallthru
          _
        // Predicated region
        $region45: #{tpu_custom_call.1} parent=39 // pred_check
          %p246 = pneg %p65
        $region46: #{tpu_custom_call.1} parent=39 // pred_check_branch
          %248 = sbr.rel (%p246) target = $region48
        $region47: #{tpu_custom_call.1} parent=39 // pred_region
          %250 = dma.done [#allocation8], 10240
        $region48: #{tpu_custom_call.1} parent=39 // pred_fallthru
          _
        // Predicated region
        $region49: #{tpu_custom_call.1} parent=39 // pred_check
          %p251 = pneg %p107
        $region50: #{tpu_custom_call.1} parent=39 // pred_check_branch
          %253 = sbr.rel (%p251) target = $region52
        $region51: #{tpu_custom_call.1} parent=39 // pred_region
          %255 = dma.done [#allocation8], 10240
        $region52: #{tpu_custom_call.1} parent=39 // pred_fallthru
          _
        %s256 = sand.u32 %s31, 1
        %s257 = scalar_lea.sflag [#allocation5], %s256
        %s258 = sand.u32 %s31, 1
        %s259 = smul.addr %s258, 16
        %s260 = scalar_lea.vmem [#allocation4], %s259
        %p261 = pneg %p44
        %p262 = pneg %p41
        %p263 = pneg %p65
        %p264 = pneg %p62
        %p265 = pneg %p86
        %p266 = pneg %p83
        %p267 = pneg %p107
        %p268 = pneg %p104
        %p269 = pneg %p128
        %p270 = pneg %p125
        %p271 = pneg %p154
        %p272 = pneg %p151
        %s273 = sand.u32 %s141, 1
        %s274 = scalar_lea.sflag [#allocation6], %s273
        %s275 = sand.u32 %s141, 1
        %s276 = smul.addr %s275, 16
        %s277 = scalar_lea.vmem [#allocation10], %s276
        %278 = vst [vmem:[#allocation2] sm:$0xff] 0.0
        %279 = vst [vmem:[#allocation2 + $0x18] sm:$0xff] 0.0
        %280 = vst [vmem:[#allocation2 + $0x20] sm:$0xff] 0.0
        %v281 = vld [vmem:[%s240] sm:$0xff]
        %v282 = vld [vmem:[%s240 + $0x8] sm:$0xff]
        %v283 = vmax.f32 %v281, 0.0
        %v284 = vmax.f32 %v282, 0.0
        %285 = vst [vmem:[#allocation2 + $0x8] sm:$0xff] %v283
        %286 = vst [vmem:[#allocation2 + $0x10] sm:$0xff] %v284
        %v287 = vld [vmem:[%s2] sm:$0x1]
        %v289 = vperm.slane %v287, 0
        %291 = vst [vmem:[#allocation3] sm:$0xff] %v289
        %292 = vst [vmem:[#allocation3 + $0x8] sm:$0xff] %v289
        %293 = vst [vmem:[#allocation3 + $0x10] sm:$0xff] %v289
        %v294 = vld [vmem:[#allocation3] sm:$0xff]
        %v295 = vld [vmem:[#allocation3 + $0x8] sm:$0xff]
        %v296 = vld [vmem:[#allocation3 + $0x10] sm:$0xff]
        %v297 = vld [vmem:[#allocation2 + $0x6] sm:$0xff]
        %v298 = vld [vmem:[#allocation2 + $0xe] sm:$0xff]
        %v299 = vld [vmem:[#allocation2 + $0x16] sm:$0xff]
        %v300 = vld [vmem:[#allocation7] sm:$0xff]
        %v301 = vld [vmem:[#allocation7 + $0x8] sm:$0xff]
        %v302 = vld [vmem:[#allocation7 + $0x10] sm:$0xff]
        %v303 = vld [vmem:[#allocation7 + $0x18] sm:$0xff]
        %v304 = vld [vmem:[#allocation7 + $0x20] sm:$0xff]
        %v305 = vld [vmem:[#allocation7 + $0x28] sm:$0xff]
        %v306 = vld [vmem:[#allocation7 + $0x30] sm:$0xff]
        %v307 = vld [vmem:[#allocation7 + $0x38] sm:$0xff]
        %v308 = vld [vmem:[#allocation7 + $0x40] sm:$0xff]
        %v309 = vld [vmem:[#allocation7 + $0x48] sm:$0xff]
        %v310 = vld [vmem:[#allocation7 + $0x50] sm:$0xff]
        %v311 = vld [vmem:[#allocation7 + $0x58] sm:$0xff]
        %v312 = vld [vmem:[#allocation7 + $0x60] sm:$0xff]
        %v313 = vld [vmem:[#allocation7 + $0x68] sm:$0xff]
        %v314 = vld [vmem:[#allocation7 + $0x70] sm:$0xff]
        %v315 = vld [vmem:[#allocation7 + $0x78] sm:$0xff]
        %316 = vmatpush.msra.mxu0 %v315
        %317 = vmatpush.msra.mxu0 %v314
        %318 = vmatpush.msra.mxu0 %v313
        %319 = vmatpush.msra.mxu0 %v312
        %320 = vmatpush.msra.mxu0 %v311
        %321 = vmatpush.msra.mxu0 %v310
        %322 = vmatpush.msra.mxu0 %v309
        %323 = vmatpush.msra.mxu0 %v308
        %324 = vmatpush.msra.mxu0 %v307
        %325 = vmatpush.msra.mxu0 %v306
        %326 = vmatpush.msra.mxu0 %v305
        %327 = vmatpush.msra.mxu0 %v304
        %328 = vmatpush.msra.mxu0 %v303
        %329 = vmatpush.msra.mxu0 %v302
        %330 = vmatpush.msra.mxu0 %v301
        %331 = vmatpush.msra.mxu0 %v300
        %332 = vmatmul.f32.gmra.mxu0 %v297
        %v333 = vpop.f32.mrf.mxu0
        %v334 = vadd.f32 0.0, %v333
        %335 = vmatmul.f32.gmra.mxu0 %v298
        %v336 = vpop.f32.mrf.mxu0
        %v337 = vadd.f32 0.0, %v336
        %338 = vmatmul.f32.gmra.mxu0 %v299
        %v339 = vpop.f32.mrf.mxu0
        %v340 = vadd.f32 0.0, %v339
        %341 = vdwg.mxu0
        %v342 = vadd.f32 %v294, %v334
        %v343 = vadd.f32 %v295, %v337
        %v344 = vadd.f32 %v296, %v340
        %345 = vst [vmem:[#allocation3] sm:$0xff] %v342
        %346 = vst [vmem:[#allocation3 + $0x8] sm:$0xff] %v343
        %347 = vst [vmem:[#allocation3 + $0x10] sm:$0xff] %v344
        %v348 = vld [vmem:[#allocation3] sm:$0xff]
        %v349 = vld [vmem:[#allocation3 + $0x8] sm:$0xff]
        %v350 = vld [vmem:[#allocation3 + $0x10] sm:$0xff]
        %v351 = vld [vmem:[#allocation2 + $0x7] sm:$0xff]
        %v352 = vld [vmem:[#allocation2 + $0xf] sm:$0xff]
        %v353 = vld [vmem:[#allocation2 + $0x17] sm:$0xff]
        %s354 = scalar_lea.vmem [#allocation7], 128
        %v355 = vld [vmem:[%s354] sm:$0xff]
        %v356 = vld [vmem:[%s354 + $0x8] sm:$0xff]
        %v357 = vld [vmem:[%s354 + $0x10] sm:$0xff]
        %v358 = vld [vmem:[%s354 + $0x18] sm:$0xff]
        %v359 = vld [vmem:[%s354 + $0x20] sm:$0xff]
        %v360 = vld [vmem:[%s354 + $0x28] sm:$0xff]
        %v361 = vld [vmem:[%s354 + $0x30] sm:$0xff]
        %v362 = vld [vmem:[%s354 + $0x38] sm:$0xff]
        %v363 = vld [vmem:[%s354 + $0x40] sm:$0xff]
        %v364 = vld [vmem:[%s354 + $0x48] sm:$0xff]
        %v365 = vld [vmem:[%s354 + $0x50] sm:$0xff]
        %v366 = vld [vmem:[%s354 + $0x58] sm:$0xff]
        %v367 = vld [vmem:[%s354 + $0x60] sm:$0xff]
        %v368 = vld [vmem:[%s354 + $0x68] sm:$0xff]
        %v369 = vld [vmem:[%s354 + $0x70] sm:$0xff]
        %v370 = vld [vmem:[%s354 + $0x78] sm:$0xff]
        %371 = vmatpush.msra.mxu0 %v370
        %372 = vmatpush.msra.mxu0 %v369
        %373 = vmatpush.msra.mxu0 %v368
        %374 = vmatpush.msra.mxu0 %v367
        %375 = vmatpush.msra.mxu0 %v366
        %376 = vmatpush.msra.mxu0 %v365
        %377 = vmatpush.msra.mxu0 %v364
        %378 = vmatpush.msra.mxu0 %v363
        %379 = vmatpush.msra.mxu0 %v362
        %380 = vmatpush.msra.mxu0 %v361
        %381 = vmatpush.msra.mxu0 %v360
        %382 = vmatpush.msra.mxu0 %v359
        %383 = vmatpush.msra.mxu0 %v358
        %384 = vmatpush.msra.mxu0 %v357
        %385 = vmatpush.msra.mxu0 %v356
        %386 = vmatpush.msra.mxu0 %v355
        %387 = vmatmul.f32.gmra.mxu0 %v351
        %v388 = vpop.f32.mrf.mxu0
        %v389 = vadd.f32 0.0, %v388
        %390 = vmatmul.f32.gmra.mxu0 %v352
        %v391 = vpop.f32.mrf.mxu0
        %v392 = vadd.f32 0.0, %v391
        %393 = vmatmul.f32.gmra.mxu0 %v353
        %v394 = vpop.f32.mrf.mxu0
        %v395 = vadd.f32 0.0, %v394
        %396 = vdwg.mxu0
        %v397 = vadd.f32 %v348, %v389
        %v398 = vadd.f32 %v349, %v392
        %v399 = vadd.f32 %v350, %v395
        %400 = vst [vmem:[#allocation3] sm:$0xff] %v397
        %401 = vst [vmem:[#allocation3 + $0x8] sm:$0xff] %v398
        %402 = vst [vmem:[#allocation3 + $0x10] sm:$0xff] %v399
        %v403 = vld [vmem:[#allocation3] sm:$0xff]
        %v404 = vld [vmem:[#allocation3 + $0x8] sm:$0xff]
        %v405 = vld [vmem:[#allocation3 + $0x10] sm:$0xff]
        %v406 = vld [vmem:[#allocation2 + $0x8] sm:$0xff]
        %v407 = vld [vmem:[#allocation2 + $0x10] sm:$0xff]
        %v408 = vld [vmem:[#allocation2 + $0x18] sm:$0xff]
        %s409 = scalar_lea.vmem [#allocation7], 256
        %v410 = vld [vmem:[%s409] sm:$0xff]
        %v411 = vld [vmem:[%s409 + $0x8] sm:$0xff]
        %v412 = vld [vmem:[%s409 + $0x10] sm:$0xff]
        %v413 = vld [vmem:[%s409 + $0x18] sm:$0xff]
        %v414 = vld [vmem:[%s409 + $0x20] sm:$0xff]
        %v415 = vld [vmem:[%s409 + $0x28] sm:$0xff]
        %v416 = vld [vmem:[%s409 + $0x30] sm:$0xff]
        %v417 = vld [vmem:[%s409 + $0x38] sm:$0xff]
        %v418 = vld [vmem:[%s409 + $0x40] sm:$0xff]
        %v419 = vld [vmem:[%s409 + $0x48] sm:$0xff]
        %v420 = vld [vmem:[%s409 + $0x50] sm:$0xff]
        %v421 = vld [vmem:[%s409 + $0x58] sm:$0xff]
        %v422 = vld [vmem:[%s409 + $0x60] sm:$0xff]
        %v423 = vld [vmem:[%s409 + $0x68] sm:$0xff]
        %v424 = vld [vmem:[%s409 + $0x70] sm:$0xff]
        %v425 = vld [vmem:[%s409 + $0x78] sm:$0xff]
        %426 = vmatpush.msra.mxu0 %v425
        %427 = vmatpush.msra.mxu0 %v424
        %428 = vmatpush.msra.mxu0 %v423
        %429 = vmatpush.msra.mxu0 %v422
        %430 = vmatpush.msra.mxu0 %v421
        %431 = vmatpush.msra.mxu0 %v420
        %432 = vmatpush.msra.mxu0 %v419
        %433 = vmatpush.msra.mxu0 %v418
        %434 = vmatpush.msra.mxu0 %v417
        %435 = vmatpush.msra.mxu0 %v416
        %436 = vmatpush.msra.mxu0 %v415
        %437 = vmatpush.msra.mxu0 %v414
        %438 = vmatpush.msra.mxu0 %v413
        %439 = vmatpush.msra.mxu0 %v412
        %440 = vmatpush.msra.mxu0 %v411
        %441 = vmatpush.msra.mxu0 %v410
        %442 = vmatmul.f32.gmra.mxu0 %v406
        %v443 = vpop.f32.mrf.mxu0
        %v444 = vadd.f32 0.0, %v443
        %445 = vmatmul.f32.gmra.mxu0 %v407
        %v446 = vpop.f32.mrf.mxu0
        %v447 = vadd.f32 0.0, %v446
        %448 = vmatmul.f32.gmra.mxu0 %v408
        %v449 = vpop.f32.mrf.mxu0
        %v450 = vadd.f32 0.0, %v449
        %451 = vdwg.mxu0
        %v452 = vadd.f32 %v403, %v444
        %v453 = vadd.f32 %v404, %v447
        %v454 = vadd.f32 %v405, %v450
        %455 = vst [vmem:[#allocation3] sm:$0xff] %v452
        %456 = vst [vmem:[#allocation3 + $0x8] sm:$0xff] %v453
        %457 = vst [vmem:[#allocation3 + $0x10] sm:$0xff] %v454
        %v458 = vld [vmem:[#allocation3] sm:$0xff]
        %v459 = vld [vmem:[#allocation3 + $0x8] sm:$0xff]
        %v460 = vld [vmem:[#allocation3 + $0x10] sm:$0xff]
        %v461 = vld [vmem:[#allocation2 + $0x9] sm:$0xff]
        %v462 = vld [vmem:[#allocation2 + $0x11] sm:$0xff]
        %v463 = vld [vmem:[#allocation2 + $0x19] sm:$0xff]
        %s464 = scalar_lea.vmem [#allocation7], 384
        %v465 = vld [vmem:[%s464] sm:$0xff]
        %v466 = vld [vmem:[%s464 + $0x8] sm:$0xff]
        %v467 = vld [vmem:[%s464 + $0x10] sm:$0xff]
        %v468 = vld [vmem:[%s464 + $0x18] sm:$0xff]
        %v469 = vld [vmem:[%s464 + $0x20] sm:$0xff]
        %v470 = vld [vmem:[%s464 + $0x28] sm:$0xff]
        %v471 = vld [vmem:[%s464 + $0x30] sm:$0xff]
        %v472 = vld [vmem:[%s464 + $0x38] sm:$0xff]
        %v473 = vld [vmem:[%s464 + $0x40] sm:$0xff]
        %v474 = vld [vmem:[%s464 + $0x48] sm:$0xff]
        %v475 = vld [vmem:[%s464 + $0x50] sm:$0xff]
        %v476 = vld [vmem:[%s464 + $0x58] sm:$0xff]
        %v477 = vld [vmem:[%s464 + $0x60] sm:$0xff]
        %v478 = vld [vmem:[%s464 + $0x68] sm:$0xff]
        %v479 = vld [vmem:[%s464 + $0x70] sm:$0xff]
        %v480 = vld [vmem:[%s464 + $0x78] sm:$0xff]
        %481 = vmatpush.msra.mxu0 %v480
        %482 = vmatpush.msra.mxu0 %v479
        %483 = vmatpush.msra.mxu0 %v478
        %484 = vmatpush.msra.mxu0 %v477
        %485 = vmatpush.msra.mxu0 %v476
        %486 = vmatpush.msra.mxu0 %v475
        %487 = vmatpush.msra.mxu0 %v474
        %488 = vmatpush.msra.mxu0 %v473
        %489 = vmatpush.msra.mxu0 %v472
        %490 = vmatpush.msra.mxu0 %v471
        %491 = vmatpush.msra.mxu0 %v470
        %492 = vmatpush.msra.mxu0 %v469
        %493 = vmatpush.msra.mxu0 %v468
        %494 = vmatpush.msra.mxu0 %v467
        %495 = vmatpush.msra.mxu0 %v466
        %496 = vmatpush.msra.mxu0 %v465
        %497 = vmatmul.f32.gmra.mxu0 %v461
        %v498 = vpop.f32.mrf.mxu0
        %v499 = vadd.f32 0.0, %v498
        %500 = vmatmul.f32.gmra.mxu0 %v462
        %v501 = vpop.f32.mrf.mxu0
        %v502 = vadd.f32 0.0, %v501
        %503 = vmatmul.f32.gmra.mxu0 %v463
        %v504 = vpop.f32.mrf.mxu0
        %v505 = vadd.f32 0.0, %v504
        %506 = vdwg.mxu0
        %v507 = vadd.f32 %v458, %v499
        %v508 = vadd.f32 %v459, %v502
        %v509 = vadd.f32 %v460, %v505
        %510 = vst [vmem:[#allocation3] sm:$0xff] %v507
        %511 = vst [vmem:[#allocation3 + $0x8] sm:$0xff] %v508
        %512 = vst [vmem:[#allocation3 + $0x10] sm:$0xff] %v509
        %v513 = vld [vmem:[#allocation3] sm:$0xff]
        %v514 = vld [vmem:[#allocation3 + $0x8] sm:$0xff]
        %v515 = vld [vmem:[#allocation3 + $0x10] sm:$0xff]
        %v516 = vld [vmem:[#allocation2 + $0xa] sm:$0xff]
        %v517 = vld [vmem:[#allocation2 + $0x12] sm:$0xff]
        %v518 = vld [vmem:[#allocation2 + $0x1a] sm:$0xff]
        %s519 = scalar_lea.vmem [#allocation7], 512
        %v520 = vld [vmem:[%s519] sm:$0xff]
        %v521 = vld [vmem:[%s519 + $0x8] sm:$0xff]
        %v522 = vld [vmem:[%s519 + $0x10] sm:$0xff]
        %v523 = vld [vmem:[%s519 + $0x18] sm:$0xff]
        %v524 = vld [vmem:[%s519 + $0x20] sm:$0xff]
        %v525 = vld [vmem:[%s519 + $0x28] sm:$0xff]
        %v526 = vld [vmem:[%s519 + $0x30] sm:$0xff]
        %v527 = vld [vmem:[%s519 + $0x38] sm:$0xff]
        %v528 = vld [vmem:[%s519 + $0x40] sm:$0xff]
        %v529 = vld [vmem:[%s519 + $0x48] sm:$0xff]
        %v530 = vld [vmem:[%s519 + $0x50] sm:$0xff]
        %v531 = vld [vmem:[%s519 + $0x58] sm:$0xff]
        %v532 = vld [vmem:[%s519 + $0x60] sm:$0xff]
        %v533 = vld [vmem:[%s519 + $0x68] sm:$0xff]
        %v534 = vld [vmem:[%s519 + $0x70] sm:$0xff]
        %v535 = vld [vmem:[%s519 + $0x78] sm:$0xff]
        %536 = vmatpush.msra.mxu0 %v535
        %537 = vmatpush.msra.mxu0 %v534
        %538 = vmatpush.msra.mxu0 %v533
        %539 = vmatpush.msra.mxu0 %v532
        %540 = vmatpush.msra.mxu0 %v531
        %541 = vmatpush.msra.mxu0 %v530
        %542 = vmatpush.msra.mxu0 %v529
        %543 = vmatpush.msra.mxu0 %v528
        %544 = vmatpush.msra.mxu0 %v527
        %545 = vmatpush.msra.mxu0 %v526
        %546 = vmatpush.msra.mxu0 %v525
        %547 = vmatpush.msra.mxu0 %v524
        %548 = vmatpush.msra.mxu0 %v523
        %549 = vmatpush.msra.mxu0 %v522
        %550 = vmatpush.msra.mxu0 %v521
        %551 = vmatpush.msra.mxu0 %v520
        %552 = vmatmul.f32.gmra.mxu0 %v516
        %v553 = vpop.f32.mrf.mxu0
        %v554 = vadd.f32 0.0, %v553
        %555 = vmatmul.f32.gmra.mxu0 %v517
        %v556 = vpop.f32.mrf.mxu0
        %v557 = vadd.f32 0.0, %v556
        %558 = vmatmul.f32.gmra.mxu0 %v518
        %v559 = vpop.f32.mrf.mxu0
        %v560 = vadd.f32 0.0, %v559
        %561 = vdwg.mxu0
        %v562 = vadd.f32 %v513, %v554
        %v563 = vadd.f32 %v514, %v557
        %v564 = vadd.f32 %v515, %v560
        %565 = vst [vmem:[#allocation3] sm:$0xff] %v562
        %566 = vst [vmem:[#allocation3 + $0x8] sm:$0xff] %v563
        %567 = vst [vmem:[#allocation3 + $0x10] sm:$0xff] %v564
        %v568 = vld [vmem:[#allocation3] sm:$0xff]
        %v569 = vld [vmem:[#allocation3 + $0x8] sm:$0xff]
        %v570 = vmax.f32 %v568, 0.0
        %v571 = vmax.f32 %v569, 0.0
        %572 = vst [vmem:[#allocation2 + $0x8] sm:$0xff] %v570
        %573 = vst [vmem:[#allocation2 + $0x10] sm:$0xff] %v571
        %v574 = vld [vmem:[%s4] sm:$0x1]
        %v576 = vperm.slane %v574, 0
        %578 = vst [vmem:[#allocation3] sm:$0xff] %v576
        %579 = vst [vmem:[#allocation3 + $0x8] sm:$0xff] %v576
        %580 = vst [vmem:[#allocation3 + $0x10] sm:$0xff] %v576
        %v581 = vld [vmem:[#allocation3] sm:$0xff]
        %v582 = vld [vmem:[#allocation3 + $0x8] sm:$0xff]
        %v583 = vld [vmem:[#allocation3 + $0x10] sm:$0xff]
        %v584 = vld [vmem:[#allocation2 + $0x6] sm:$0xff]
        %v585 = vld [vmem:[#allocation2 + $0xe] sm:$0xff]
        %v586 = vld [vmem:[#allocation2 + $0x16] sm:$0xff]
        %v587 = vld [vmem:[#allocation9] sm:$0xff]
        %v588 = vld [vmem:[#allocation9 + $0x8] sm:$0xff]
        %v589 = vld [vmem:[#allocation9 + $0x10] sm:$0xff]
        %v590 = vld [vmem:[#allocation9 + $0x18] sm:$0xff]
        %v591 = vld [vmem:[#allocation9 + $0x20] sm:$0xff]
        %v592 = vld [vmem:[#allocation9 + $0x28] sm:$0xff]
        %v593 = vld [vmem:[#allocation9 + $0x30] sm:$0xff]
        %v594 = vld [vmem:[#allocation9 + $0x38] sm:$0xff]
        %v595 = vld [vmem:[#allocation9 + $0x40] sm:$0xff]
        %v596 = vld [vmem:[#allocation9 + $0x48] sm:$0xff]
        %v597 = vld [vmem:[#allocation9 + $0x50] sm:$0xff]
        %v598 = vld [vmem:[#allocation9 + $0x58] sm:$0xff]
        %v599 = vld [vmem:[#allocation9 + $0x60] sm:$0xff]
        %v600 = vld [vmem:[#allocation9 + $0x68] sm:$0xff]
        %v601 = vld [vmem:[#allocation9 + $0x70] sm:$0xff]
        %v602 = vld [vmem:[#allocation9 + $0x78] sm:$0xff]
        %603 = vmatpush.msra.mxu0 %v602
        %604 = vmatpush.msra.mxu0 %v601
        %605 = vmatpush.msra.mxu0 %v600
        %606 = vmatpush.msra.mxu0 %v599
        %607 = vmatpush.msra.mxu0 %v598
        %608 = vmatpush.msra.mxu0 %v597
        %609 = vmatpush.msra.mxu0 %v596
        %610 = vmatpush.msra.mxu0 %v595
        %611 = vmatpush.msra.mxu0 %v594
        %612 = vmatpush.msra.mxu0 %v593
        %613 = vmatpush.msra.mxu0 %v592
        %614 = vmatpush.msra.mxu0 %v591
        %615 = vmatpush.msra.mxu0 %v590
        %616 = vmatpush.msra.mxu0 %v589
        %617 = vmatpush.msra.mxu0 %v588
        %618 = vmatpush.msra.mxu0 %v587
        %619 = vmatmul.f32.gmra.mxu0 %v584
        %v620 = vpop.f32.mrf.mxu0
        %v621 = vadd.f32 0.0, %v620
        %622 = vmatmul.f32.gmra.mxu0 %v585
        %v623 = vpop.f32.mrf.mxu0
        %v624 = vadd.f32 0.0, %v623
        %625 = vmatmul.f32.gmra.mxu0 %v586
        %v626 = vpop.f32.mrf.mxu0
        %v627 = vadd.f32 0.0, %v626
        %628 = vdwg.mxu0
        %v629 = vadd.f32 %v581, %v621
        %v630 = vadd.f32 %v582, %v624
        %v631 = vadd.f32 %v583, %v627
        %632 = vst [vmem:[#allocation3] sm:$0xff] %v629
        %633 = vst [vmem:[#allocation3 + $0x8] sm:$0xff] %v630
        %634 = vst [vmem:[#allocation3 + $0x10] sm:$0xff] %v631
        %v635 = vld [vmem:[#allocation3] sm:$0xff]
        %v636 = vld [vmem:[#allocation3 + $0x8] sm:$0xff]
        %v637 = vld [vmem:[#allocation3 + $0x10] sm:$0xff]
        %v638 = vld [vmem:[#allocation2 + $0x7] sm:$0xff]
        %v639 = vld [vmem:[#allocation2 + $0xf] sm:$0xff]
        %v640 = vld [vmem:[#allocation2 + $0x17] sm:$0xff]
        %s641 = scalar_lea.vmem [#allocation9], 128
        %v642 = vld [vmem:[%s641] sm:$0xff]
        %v643 = vld [vmem:[%s641 + $0x8] sm:$0xff]
        %v644 = vld [vmem:[%s641 + $0x10] sm:$0xff]
        %v645 = vld [vmem:[%s641 + $0x18] sm:$0xff]
        %v646 = vld [vmem:[%s641 + $0x20] sm:$0xff]
        %v647 = vld [vmem:[%s641 + $0x28] sm:$0xff]
        %v648 = vld [vmem:[%s641 + $0x30] sm:$0xff]
        %v649 = vld [vmem:[%s641 + $0x38] sm:$0xff]
        %v650 = vld [vmem:[%s641 + $0x40] sm:$0xff]
        %v651 = vld [vmem:[%s641 + $0x48] sm:$0xff]
        %v652 = vld [vmem:[%s641 + $0x50] sm:$0xff]
        %v653 = vld [vmem:[%s641 + $0x58] sm:$0xff]
        %v654 = vld [vmem:[%s641 + $0x60] sm:$0xff]
        %v655 = vld [vmem:[%s641 + $0x68] sm:$0xff]
        %v656 = vld [vmem:[%s641 + $0x70] sm:$0xff]
        %v657 = vld [vmem:[%s641 + $0x78] sm:$0xff]
        %658 = vmatpush.msra.mxu0 %v657
        %659 = vmatpush.msra.mxu0 %v656
        %660 = vmatpush.msra.mxu0 %v655
        %661 = vmatpush.msra.mxu0 %v654
        %662 = vmatpush.msra.mxu0 %v653
        %663 = vmatpush.msra.mxu0 %v652
        %664 = vmatpush.msra.mxu0 %v651
        %665 = vmatpush.msra.mxu0 %v650
        %666 = vmatpush.msra.mxu0 %v649
        %667 = vmatpush.msra.mxu0 %v648
        %668 = vmatpush.msra.mxu0 %v647
        %669 = vmatpush.msra.mxu0 %v646
        %670 = vmatpush.msra.mxu0 %v645
        %671 = vmatpush.msra.mxu0 %v644
        %672 = vmatpush.msra.mxu0 %v643
        %673 = vmatpush.msra.mxu0 %v642
        %674 = vmatmul.f32.gmra.mxu0 %v638
        %v675 = vpop.f32.mrf.mxu0
        %v676 = vadd.f32 0.0, %v675
        %677 = vmatmul.f32.gmra.mxu0 %v639
        %v678 = vpop.f32.mrf.mxu0
        %v679 = vadd.f32 0.0, %v678
        %680 = vmatmul.f32.gmra.mxu0 %v640
        %v681 = vpop.f32.mrf.mxu0
        %v682 = vadd.f32 0.0, %v681
        %683 = vdwg.mxu0
        %v684 = vadd.f32 %v635, %v676
        %v685 = vadd.f32 %v636, %v679
        %v686 = vadd.f32 %v637, %v682
        %687 = vst [vmem:[#allocation3] sm:$0xff] %v684
        %688 = vst [vmem:[#allocation3 + $0x8] sm:$0xff] %v685
        %689 = vst [vmem:[#allocation3 + $0x10] sm:$0xff] %v686
        %v690 = vld [vmem:[#allocation3] sm:$0xff]
        %v691 = vld [vmem:[#allocation3 + $0x8] sm:$0xff]
        %v692 = vld [vmem:[#allocation3 + $0x10] sm:$0xff]
        %v693 = vld [vmem:[#allocation2 + $0x8] sm:$0xff]
        %v694 = vld [vmem:[#allocation2 + $0x10] sm:$0xff]
        %v695 = vld [vmem:[#allocation2 + $0x18] sm:$0xff]
        %s696 = scalar_lea.vmem [#allocation9], 256
        %v697 = vld [vmem:[%s696] sm:$0xff]
        %v698 = vld [vmem:[%s696 + $0x8] sm:$0xff]
        %v699 = vld [vmem:[%s696 + $0x10] sm:$0xff]
        %v700 = vld [vmem:[%s696 + $0x18] sm:$0xff]
        %v701 = vld [vmem:[%s696 + $0x20] sm:$0xff]
        %v702 = vld [vmem:[%s696 + $0x28] sm:$0xff]
        %v703 = vld [vmem:[%s696 + $0x30] sm:$0xff]
        %v704 = vld [vmem:[%s696 + $0x38] sm:$0xff]
        %v705 = vld [vmem:[%s696 + $0x40] sm:$0xff]
        %v706 = vld [vmem:[%s696 + $0x48] sm:$0xff]
        %v707 = vld [vmem:[%s696 + $0x50] sm:$0xff]
        %v708 = vld [vmem:[%s696 + $0x58] sm:$0xff]
        %v709 = vld [vmem:[%s696 + $0x60] sm:$0xff]
        %v710 = vld [vmem:[%s696 + $0x68] sm:$0xff]
        %v711 = vld [vmem:[%s696 + $0x70] sm:$0xff]
        %v712 = vld [vmem:[%s696 + $0x78] sm:$0xff]
        %713 = vmatpush.msra.mxu0 %v712
        %714 = vmatpush.msra.mxu0 %v711
        %715 = vmatpush.msra.mxu0 %v710
        %716 = vmatpush.msra.mxu0 %v709
        %717 = vmatpush.msra.mxu0 %v708
        %718 = vmatpush.msra.mxu0 %v707
        %719 = vmatpush.msra.mxu0 %v706
        %720 = vmatpush.msra.mxu0 %v705
        %721 = vmatpush.msra.mxu0 %v704
        %722 = vmatpush.msra.mxu0 %v703
        %723 = vmatpush.msra.mxu0 %v702
        %724 = vmatpush.msra.mxu0 %v701
        %725 = vmatpush.msra.mxu0 %v700
        %726 = vmatpush.msra.mxu0 %v699
        %727 = vmatpush.msra.mxu0 %v698
        %728 = vmatpush.msra.mxu0 %v697
        %729 = vmatmul.f32.gmra.mxu0 %v693
        %v730 = vpop.f32.mrf.mxu0
        %v731 = vadd.f32 0.0, %v730
        %732 = vmatmul.f32.gmra.mxu0 %v694
        %v733 = vpop.f32.mrf.mxu0
        %v734 = vadd.f32 0.0, %v733
        %735 = vmatmul.f32.gmra.mxu0 %v695
        %v736 = vpop.f32.mrf.mxu0
        %v737 = vadd.f32 0.0, %v736
        %738 = vdwg.mxu0
        %v739 = vadd.f32 %v690, %v731
        %v740 = vadd.f32 %v691, %v734
        %v741 = vadd.f32 %v692, %v737
        %742 = vst [vmem:[#allocation3] sm:$0xff] %v739
        %743 = vst [vmem:[#allocation3 + $0x8] sm:$0xff] %v740
        %744 = vst [vmem:[#allocation3 + $0x10] sm:$0xff] %v741
        %v745 = vld [vmem:[#allocation3] sm:$0xff]
        %v746 = vld [vmem:[#allocation3 + $0x8] sm:$0xff]
        %v747 = vld [vmem:[#allocation3 + $0x10] sm:$0xff]
        %v748 = vld [vmem:[#allocation2 + $0x9] sm:$0xff]
        %v749 = vld [vmem:[#allocation2 + $0x11] sm:$0xff]
        %v750 = vld [vmem:[#allocation2 + $0x19] sm:$0xff]
        %s751 = scalar_lea.vmem [#allocation9], 384
        %v752 = vld [vmem:[%s751] sm:$0xff]
        %v753 = vld [vmem:[%s751 + $0x8] sm:$0xff]
        %v754 = vld [vmem:[%s751 + $0x10] sm:$0xff]
        %v755 = vld [vmem:[%s751 + $0x18] sm:$0xff]
        %v756 = vld [vmem:[%s751 + $0x20] sm:$0xff]
        %v757 = vld [vmem:[%s751 + $0x28] sm:$0xff]
        %v758 = vld [vmem:[%s751 + $0x30] sm:$0xff]
        %v759 = vld [vmem:[%s751 + $0x38] sm:$0xff]
        %v760 = vld [vmem:[%s751 + $0x40] sm:$0xff]
        %v761 = vld [vmem:[%s751 + $0x48] sm:$0xff]
        %v762 = vld [vmem:[%s751 + $0x50] sm:$0xff]
        %v763 = vld [vmem:[%s751 + $0x58] sm:$0xff]
        %v764 = vld [vmem:[%s751 + $0x60] sm:$0xff]
        %v765 = vld [vmem:[%s751 + $0x68] sm:$0xff]
        %v766 = vld [vmem:[%s751 + $0x70] sm:$0xff]
        %v767 = vld [vmem:[%s751 + $0x78] sm:$0xff]
        %768 = vmatpush.msra.mxu0 %v767
        %769 = vmatpush.msra.mxu0 %v766
        %770 = vmatpush.msra.mxu0 %v765
        %771 = vmatpush.msra.mxu0 %v764
        %772 = vmatpush.msra.mxu0 %v763
        %773 = vmatpush.msra.mxu0 %v762
        %774 = vmatpush.msra.mxu0 %v761
        %775 = vmatpush.msra.mxu0 %v760
        %776 = vmatpush.msra.mxu0 %v759
        %777 = vmatpush.msra.mxu0 %v758
        %778 = vmatpush.msra.mxu0 %v757
        %779 = vmatpush.msra.mxu0 %v756
        %780 = vmatpush.msra.mxu0 %v755
        %781 = vmatpush.msra.mxu0 %v754
        %782 = vmatpush.msra.mxu0 %v753
        %783 = vmatpush.msra.mxu0 %v752
        %784 = vmatmul.f32.gmra.mxu0 %v748
        %v785 = vpop.f32.mrf.mxu0
        %v786 = vadd.f32 0.0, %v785
        %787 = vmatmul.f32.gmra.mxu0 %v749
        %v788 = vpop.f32.mrf.mxu0
        %v789 = vadd.f32 0.0, %v788
        %790 = vmatmul.f32.gmra.mxu0 %v750
        %v791 = vpop.f32.mrf.mxu0
        %v792 = vadd.f32 0.0, %v791
        %793 = vdwg.mxu0
        %v794 = vadd.f32 %v745, %v786
        %v795 = vadd.f32 %v746, %v789
        %v796 = vadd.f32 %v747, %v792
        %797 = vst [vmem:[#allocation3] sm:$0xff] %v794
        %798 = vst [vmem:[#allocation3 + $0x8] sm:$0xff] %v795
        %799 = vst [vmem:[#allocation3 + $0x10] sm:$0xff] %v796
        %v800 = vld [vmem:[#allocation3] sm:$0xff]
        %v801 = vld [vmem:[#allocation3 + $0x8] sm:$0xff]
        %v802 = vld [vmem:[#allocation3 + $0x10] sm:$0xff]
        %v803 = vld [vmem:[#allocation2 + $0xa] sm:$0xff]
        %v804 = vld [vmem:[#allocation2 + $0x12] sm:$0xff]
        %v805 = vld [vmem:[#allocation2 + $0x1a] sm:$0xff]
        %s806 = scalar_lea.vmem [#allocation9], 512
        %v807 = vld [vmem:[%s806] sm:$0xff]
        %v808 = vld [vmem:[%s806 + $0x8] sm:$0xff]
        %v809 = vld [vmem:[%s806 + $0x10] sm:$0xff]
        %v810 = vld [vmem:[%s806 + $0x18] sm:$0xff]
        %v811 = vld [vmem:[%s806 + $0x20] sm:$0xff]
        %v812 = vld [vmem:[%s806 + $0x28] sm:$0xff]
        %v813 = vld [vmem:[%s806 + $0x30] sm:$0xff]
        %v814 = vld [vmem:[%s806 + $0x38] sm:$0xff]
        %v815 = vld [vmem:[%s806 + $0x40] sm:$0xff]
        %v816 = vld [vmem:[%s806 + $0x48] sm:$0xff]
        %v817 = vld [vmem:[%s806 + $0x50] sm:$0xff]
        %v818 = vld [vmem:[%s806 + $0x58] sm:$0xff]
        %v819 = vld [vmem:[%s806 + $0x60] sm:$0xff]
        %v820 = vld [vmem:[%s806 + $0x68] sm:$0xff]
        %v821 = vld [vmem:[%s806 + $0x70] sm:$0xff]
        %v822 = vld [vmem:[%s806 + $0x78] sm:$0xff]
        %823 = vmatpush.msra.mxu0 %v822
        %824 = vmatpush.msra.mxu0 %v821
        %825 = vmatpush.msra.mxu0 %v820
        %826 = vmatpush.msra.mxu0 %v819
        %827 = vmatpush.msra.mxu0 %v818
        %828 = vmatpush.msra.mxu0 %v817
        %829 = vmatpush.msra.mxu0 %v816
        %830 = vmatpush.msra.mxu0 %v815
        %831 = vmatpush.msra.mxu0 %v814
        %832 = vmatpush.msra.mxu0 %v813
        %833 = vmatpush.msra.mxu0 %v812
        %834 = vmatpush.msra.mxu0 %v811
        %835 = vmatpush.msra.mxu0 %v810
        %836 = vmatpush.msra.mxu0 %v809
        %837 = vmatpush.msra.mxu0 %v808
        %838 = vmatpush.msra.mxu0 %v807
        %839 = vmatmul.f32.gmra.mxu0 %v803
        %v840 = vpop.f32.mrf.mxu0
        %v841 = vadd.f32 0.0, %v840
        %842 = vmatmul.f32.gmra.mxu0 %v804
        %v843 = vpop.f32.mrf.mxu0
        %v844 = vadd.f32 0.0, %v843
        %845 = vmatmul.f32.gmra.mxu0 %v805
        %v846 = vpop.f32.mrf.mxu0
        %v847 = vadd.f32 0.0, %v846
        %848 = vdwg.mxu0
        %v849 = vadd.f32 %v800, %v841
        %v850 = vadd.f32 %v801, %v844
        %v851 = vadd.f32 %v802, %v847
        %852 = vst [vmem:[#allocation3] sm:$0xff] %v849
        %853 = vst [vmem:[#allocation3 + $0x8] sm:$0xff] %v850
        %854 = vst [vmem:[#allocation3 + $0x10] sm:$0xff] %v851
        %v855 = vld [vmem:[%s240] sm:$0xff]
        %v856 = vld [vmem:[%s240 + $0x8] sm:$0xff]
        %v857 = vld [vmem:[#allocation3] sm:$0xff]
        %v858 = vld [vmem:[#allocation3 + $0x8] sm:$0xff]
        %v859 = vadd.f32 %v855, %v857
        %v860 = vadd.f32 %v856, %v858
        %861 = vst [vmem:[%s277] sm:$0xff] %v859
        %862 = vst [vmem:[%s277 + $0x8] sm:$0xff] %v860
        %s863 = sand.u32 %s141, 1
        %s864 = scalar_lea.sflag [#allocation6], %s863
        %s865 = sand.u32 %s141, 1
        %s866 = smul.addr %s865, 16
        %s867 = scalar_lea.vmem [#allocation10], %s866
        // Predicated region
        $region53: #{tpu_custom_call.1} parent=39 // pred_check
          %p868 = pneg %p151
        $region54: #{tpu_custom_call.1} parent=39 // pred_check_branch
          %870 = sbr.rel (%p868) target = $region56
        $region55: #{tpu_custom_call.1} parent=39 // pred_region
          %872 = vsyncadd %s864, 0
          %s873 = smul.addr %s23, 2
          %s874 = smul.addr %s873, 8
          %s875 = scalar_lea.hbm %s5, %s874
          %s876 = sshll.u32 %s867, 4
          %s877 = int_to_ptr.vmem [resolvable:$true] %s876
          %s878 = sshll.u32 %s875, 4
          %s879 = int_to_ptr.hbm [resolvable:$true] %s878
          %884 = dma.vmem_to_hbm [thread:$0]  %s877, 256, %s879, %s864, 128, 128, 8
        $region56: #{tpu_custom_call.1} parent=39 // pred_fallthru
          _
      $region40: #{tpu_custom_call.1} parent=5 // pred_fallthru
        _
      %p885 = scmp.le.s32.totalorder 2, %s18
      // Predicated region
      $region57: #{tpu_custom_call.1} parent=5 // pred_check
        %p886 = pneg %p885
      $region58: #{tpu_custom_call.1} parent=5 // pred_check_branch
        %888 = sbr.rel (%p886) target = $region60
      $region59: #{tpu_custom_call.1} parent=5 // pred_region
        %s889 = ssub.s32 %s18, 2
        // Predicated region
        $region61: #{tpu_custom_call.1} parent=59 // pred_check
          %p890 = pneg %p157
        $region62: #{tpu_custom_call.1} parent=59 // pred_check_branch
          %892 = sbr.rel (%p890) target = $region64
        $region63: #{tpu_custom_call.1} parent=59 // pred_region
          %s893 = sand.u32 %s142, 1
          %s894 = scalar_lea.sflag [#allocation6], %s893
          %s895 = sand.u32 %s142, 1
          %s896 = smul.addr %s895, 16
          %s897 = scalar_lea.vmem [#allocation10], %s896
          %899 = dma.done %s894, 256
        $region64: #{tpu_custom_call.1} parent=59 // pred_fallthru
          _
      $region60: #{tpu_custom_call.1} parent=5 // pred_fallthru
        _
    $region6: #{tpu_custom_call.1} parent=1 // loop_footer
      %s22 = sadd.s32 1, %s18
    $region7: #{tpu_custom_call.1} parent=1 // loop_footer_branch
      %17 = sbr.rel target = $region3
    $region8: #{tpu_custom_call.1} parent=1 // loop_exit
      _
    %900 = vsyncpa [#allocation5], 1
    %s901 = scalar_lea.sflag [#allocation5], 1
    %902 = vsyncpa %s901, 1
    %903 = vsyncpa [#allocation8], 1
    %904 = vsyncpa [#allocation6], 1
    %s905 = scalar_lea.sflag [#allocation6], 1
    %906 = vsyncpa %s905, 1

</llo_original>
